<compile_context>
chip_gen: v7x
topology: tpu7x:2x2x1
jax: 0.10.0
libtpu: 0.0.40
codegen_flags: <defaults>
</compile_context>

<pallas_src>
import functools
import math

import numpy as np
import jax
import jax.numpy as jnp
from jax import lax
from jax.experimental import pallas as pl
from jax.experimental.pallas import tpu as pltpu

DROP_P = 0.1
BN_EPS = 1e-5
RATIO = 0.5


def _round_up(x, m):
    return ((x + m - 1) // m) * m


def _choose_tm(n_pad_min):
    # Keep a double-buffered bf16 (TM, N) A tile within ~24 MiB (safe on v7x's
    # 64 MiB VMEM with the 48 MiB scoped limit below).
    cap = (24 * 1024 * 1024) // max(4 * n_pad_min, 1)
    cap = max(8, (cap // 8) * 8)
    return max(8, min(256, n_pad_min, cap))


# ---------------------------------------------------------------------------
# Pass 1: GCNConv (A_tile @ X @ W + b) + ReLU + BN partial statistics
# ---------------------------------------------------------------------------
def gcn_conv_relu_stats_kernel(a_ref, x_ref, w_ref, b_ref,
                               h_ref, sum_ref, sq_ref,
                               *, apply_w, tm, n_real):
    # bf16 MXU inputs, f32 accumulation.
    ax = jnp.dot(a_ref[...], x_ref[...], preferred_element_type=jnp.float32)
    if apply_w:
        h = jnp.dot(ax.astype(jnp.bfloat16), w_ref[...],
                    preferred_element_type=jnp.float32)
    else:
        h = ax  # x_ref already carries X @ W (Fin > Fout association)
    h = jnp.maximum(h + b_ref[...], 0.0)

    # Mask padded rows so BatchNorm statistics cover only the real N nodes.
    row0 = pl.program_id(0) * tm
    rows = row0 + lax.broadcasted_iota(jnp.int32, (tm, 1), 0)
    hv = jnp.where(rows < n_real, h, 0.0)

    h_ref[...] = hv
    ps = jnp.sum(hv, axis=0, keepdims=True)          # (1, F)
    ss = jnp.sum(hv * hv, axis=0, keepdims=True)     # (1, F)
    # Lane-dense (8, F) slabs per tile; wrapper reads row 0 of each tile.
    sum_ref[...] = jnp.broadcast_to(ps[None], sum_ref.shape)
    sq_ref[...] = jnp.broadcast_to(ss[None], sq_ref.shape)


# ---------------------------------------------------------------------------
# Pass 2: BatchNorm (folded) + Dropout + TopK score/gate
# ---------------------------------------------------------------------------
def bn_dropout_gate_kernel(h_ref, scale_ref, shift_ref, p_ref, bits_ref,
                           out_ref, score_ref,
                           *, keep_threshold, keep_scale):
    # BatchNorm with pre-folded scale/shift: h*gamma/sqrt(var+eps) + (beta - ...)
    h = h_ref[...] * scale_ref[...] + shift_ref[...]

    # Inverted dropout: compare raw uint32 bits against an integer threshold.
    keep = bits_ref[...] >= jnp.uint32(keep_threshold)
    h = jnp.where(keep, h * keep_scale, 0.0)

    # TopKPooling gate: s = tanh(sum(h * p_hat, lanes)) — VPU mul + lane reduce,
    # no 1-lane MXU matvec.
    s = jnp.tanh(jnp.sum(h * p_ref[...], axis=-1, keepdims=True))
    score_ref[...] = jnp.broadcast_to(s, score_ref.shape)  # lane-dense slab
    out_ref[...] = h * s


# ---------------------------------------------------------------------------
# Wrapper: padding, tiling, the two pallas_calls, BN stat combine
# ---------------------------------------------------------------------------
def run_gcn_block_kernel(a_hat, x, w, b, gamma, beta, p_hat, key):
    n, fin = x.shape
    fout = w.shape[1]

    n_pad_min = _round_up(n, 8)
    tm = _choose_tm(n_pad_min)
    n_pad = _round_up(n, tm)
    num_tiles = n_pad // tm

    a_pad = jnp.pad(a_hat, ((0, n_pad - n), (0, n_pad - n))).astype(jnp.bfloat16)
    x_pad = jnp.pad(x.astype(jnp.float32), ((0, n_pad - n), (0, 0)))

    # Pick the cheaper matmul association: (A@X)@W when Fin <= Fout, else A@(XW).
    apply_w = fin <= fout
    xm = x_pad.astype(jnp.bfloat16) if apply_w else jnp.dot(x_pad, w).astype(jnp.bfloat16)
    w_bf = w.astype(jnp.bfloat16)

    cparams = pltpu.CompilerParams(
        dimension_semantics=("parallel",),
        vmem_limit_bytes=48 * 1024 * 1024,
    )

    h_pad, psum, psq = pl.pallas_call(
        functools.partial(gcn_conv_relu_stats_kernel,
                          apply_w=apply_w, tm=tm, n_real=n),
        grid=(num_tiles,),
        in_specs=[
            pl.BlockSpec((tm, n_pad), lambda i: (i, 0)),        # A row tiles (streamed)
            pl.BlockSpec((n_pad, xm.shape[1]), lambda i: (0, 0)),  # X (resident)
            pl.BlockSpec((fin, fout), lambda i: (0, 0)),        # W (resident)
            pl.BlockSpec((1, fout), lambda i: (0, 0)),          # bias
        ],
        out_specs=[
            pl.BlockSpec((tm, fout), lambda i: (i, 0)),         # H
            pl.BlockSpec((1, 8, fout), lambda i: (i, 0, 0)),    # partial sums
            pl.BlockSpec((1, 8, fout), lambda i: (i, 0, 0)),    # partial sumsq
        ],
        out_shape=[
            jax.ShapeDtypeStruct((n_pad, fout), jnp.float32),
            jax.ShapeDtypeStruct((num_tiles, 8, fout), jnp.float32),
            jax.ShapeDtypeStruct((num_tiles, 8, fout), jnp.float32),
        ],
        compiler_params=cparams,
    )(a_pad, xm, w_bf, b.reshape(1, -1).astype(jnp.float32))

    # Combine per-tile partials into global (biased) BN stats; fold into scale/shift.
    total = psum[:, 0, :].sum(axis=0)
    total_sq = psq[:, 0, :].sum(axis=0)
    mean = total / n
    var = jnp.maximum(total_sq / n - mean * mean, 0.0)
    inv_std = lax.rsqrt(var + BN_EPS)
    scale_vec = (gamma * inv_std).reshape(1, -1)
    shift_vec = (beta - mean * gamma * inv_std).reshape(1, -1)

    # Dropout random bits generated host-side-free with jax.random (works both
    # on real TPU and in interpret mode; each row tile gets distinct bits).
    bits = jax.random.bits(key, (n_pad, fout), dtype=jnp.uint32)
    keep_threshold = int(round(DROP_P * (1 << 32)))

    gated_pad, score_pad = pl.pallas_call(
        functools.partial(bn_dropout_gate_kernel,
                          keep_threshold=keep_threshold,
                          keep_scale=1.0 / (1.0 - DROP_P)),
        grid=(num_tiles,),
        in_specs=[
            pl.BlockSpec((tm, fout), lambda i: (i, 0)),   # H tiles
            pl.BlockSpec((1, fout), lambda i: (0, 0)),    # BN scale
            pl.BlockSpec((1, fout), lambda i: (0, 0)),    # BN shift
            pl.BlockSpec((1, fout), lambda i: (0, 0)),    # p_hat row
            pl.BlockSpec((tm, fout), lambda i: (i, 0)),   # dropout bits
        ],
        out_specs=[
            pl.BlockSpec((tm, fout), lambda i: (i, 0)),   # gated features
            pl.BlockSpec((tm, 128), lambda i: (i, 0)),    # lane-dense score slab
        ],
        out_shape=[
            jax.ShapeDtypeStruct((n_pad, fout), jnp.float32),
            jax.ShapeDtypeStruct((n_pad, 128), jnp.float32),
        ],
        compiler_params=cparams,
    )(h_pad, scale_vec, shift_vec, p_hat.reshape(1, -1).astype(jnp.float32), bits)

    return gated_pad[:n], score_pad[:n, 0]


# ---------------------------------------------------------------------------
# Plain-JAX glue
# ---------------------------------------------------------------------------
def gcn_norm_dense(edge_index, edge_weight, num_nodes):
    """Dense D^-1/2 (A + I) D^-1/2 with scalar edge weights (PyG gcn_norm)."""
    assert edge_weight.ndim == 1, "edge_attr must be a scalar weight per edge"
    src = edge_index[0]
    dst = edge_index[1]
    loop = jnp.arange(num_nodes, dtype=edge_index.dtype)
    src = jnp.concatenate([src, loop])
    dst = jnp.concatenate([dst, loop])
    w = jnp.concatenate([edge_weight.astype(jnp.float32),
                         jnp.ones((num_nodes,), jnp.float32)])
    deg = jnp.zeros((num_nodes,), jnp.float32).at[dst].add(w)
    dis = jnp.where(deg > 0, 1.0 / jnp.sqrt(deg), 0.0)
    norm = dis[src] * w * dis[dst]
    a = jnp.zeros((num_nodes, num_nodes), jnp.float32).at[dst, src].add(norm)
    return a


def topk_pool_glue(gated, score, edge_index, edge_attr, batch, ratio):
    """TopKPooling(ratio): ranking on device; variable-size compaction on host."""
    n = score.shape[0]
    num_graphs = int(jax.device_get(jnp.max(batch))) + 1

    counts = jnp.bincount(batch, length=num_graphs)
    seg_start = jnp.cumsum(counts) - counts
    order = jnp.lexsort((-score, batch))             # grouped by graph, score desc
    sorted_batch = batch[order]
    rank = jnp.arange(n) - seg_start[sorted_batch]
    k = jnp.ceil(ratio * counts.astype(jnp.float32)).astype(jnp.int32)
    keep = rank < k[sorted_batch]

    # TODO(synk): data-dependent output sizes (k per graph, filtered edges) need
    # one host sync here for the variable-size compaction.
    order_np = np.asarray(jax.device_get(order))
    keep_np = np.asarray(jax.device_get(keep))
    perm = order_np[keep_np]

    x_out = gated[perm]
    batch_out = batch[perm]

    node_map = np.full(n, -1, dtype=np.int64)
    node_map[perm] = np.arange(perm.shape[0])
    ei = np.asarray(jax.device_get(edge_index))
    ea = np.asarray(jax.device_get(edge_attr))
    src_new = node_map[ei[0]]
    dst_new = node_map[ei[1]]
    mask = (src_new >= 0) & (dst_new >= 0)
    edge_index_out = jnp.asarray(np.stack([src_new[mask], dst_new[mask]]).astype(np.int32))
    edge_attr_out = jnp.asarray(ea[mask])
    return x_out, edge_index_out, edge_attr_out, batch_out


def gcn_block_forward(x, edge_index, edge_attr, batch, params, key):
    n = x.shape[0]
    a_hat = gcn_norm_dense(edge_index, edge_attr, n)
    gated, score = run_gcn_block_kernel(
        a_hat, x, params["W"], params["b"], params["gamma"], params["beta"],
        params["p_hat"], key)
    return topk_pool_glue(gated, score, edge_index, edge_attr, batch, RATIO)


# ---------------------------------------------------------------------------
if __name__ == "__main__":
    key = jax.random.PRNGKey(0)
    num_graphs, nodes_per_graph = 2, 8
    N = num_graphs * nodes_per_graph           # 16 nodes
    Fin, Fout = 8, 32
    E_per_graph = 12

    k_x, k_src, k_off, k_ea, k_w, k_p, k_drop = jax.random.split(key, 7)

    # node features
    x = jax.random.normal(k_x, (N, Fin), dtype=jnp.float32)

    # random intra-graph directed edges (no self loops)
    src_local = jax.random.randint(k_src, (num_graphs, E_per_graph), 0, nodes_per_graph)
    off_local = jax.random.randint(k_off, (num_graphs, E_per_graph), 1, nodes_per_graph)
    dst_local = (src_local + off_local) % nodes_per_graph
    offs = (jnp.arange(num_graphs) * nodes_per_graph)[:, None]
    edge_index = jnp.stack([
        (src_local + offs).reshape(-1),
        (dst_local + offs).reshape(-1),
    ]).astype(jnp.int32)                                            # [2, 24]
    edge_attr = jax.random.uniform(k_ea, (num_graphs * E_per_graph,),
                                   dtype=jnp.float32)               # edge weights
    batch = jnp.repeat(jnp.arange(num_graphs, dtype=jnp.int32), nodes_per_graph)

    # deterministic parameter init (shapes from GCNBlock.__init__)
    W = jax.random.normal(k_w, (Fin, Fout), dtype=jnp.float32) / math.sqrt(Fin)
    b = jnp.zeros((Fout,), jnp.float32)              # GCNConv bias
    gamma = jnp.ones((Fout,), jnp.float32)           # BatchNorm weight
    beta = jnp.zeros((Fout,), jnp.float32)           # BatchNorm bias
    p = jax.random.normal(k_p, (Fout,), dtype=jnp.float32)   # TopKPooling weight
    p_hat = p / jnp.linalg.norm(p)
    params = dict(W=W, b=b, gamma=gamma, beta=beta, p_hat=p_hat)

    x_out, ei_out, ea_out, batch_out = gcn_block_forward(
        x, edge_index, edge_attr, batch, params, key=k_drop)
    jax.block_until_ready(x_out)
    jax.block_until_ready(batch_out)
    print("KERNEL_OK")
</pallas_src>

<mosaic_0001>
module attributes {stable_mosaic.version = 11 : i64} {
  func.func @gcn_conv_relu_stats_kernel(%arg0: i32, %arg1: memref<16x16xbf16, #tpu.memory_space<vmem>>, %arg2: memref<16x8xbf16, #tpu.memory_space<vmem>>, %arg3: memref<8x32xbf16, #tpu.memory_space<vmem>>, %arg4: memref<1x32xf32, #tpu.memory_space<vmem>>, %arg5: memref<16x32xf32, #tpu.memory_space<vmem>>, %arg6: memref<1x8x32xf32, #tpu.memory_space<vmem>>, %arg7: memref<1x8x32xf32, #tpu.memory_space<vmem>>) attributes {dimension_semantics = [#tpu.dimension_semantics<parallel>], iteration_bounds = array<i64: 1>, scalar_prefetch = 0 : i64, scratch_operands = 0 : i64, tpu.core_type = #tpu.core_type<tc>, window_params = [{transform_indices = @transform_0, window_bounds = array<i64: 16, 16>}, {pipeline_mode = #tpu.pipeline_mode<synchronous>, transform_indices = @transform_1, window_bounds = array<i64: 16, 8>}, {pipeline_mode = #tpu.pipeline_mode<synchronous>, transform_indices = @transform_2, window_bounds = array<i64: 8, 32>}, {pipeline_mode = #tpu.pipeline_mode<synchronous>, transform_indices = @transform_3, window_bounds = array<i64: 1, 32>}, {transform_indices = @transform_4, window_bounds = array<i64: 16, 32>}, {transform_indices = @transform_5, window_bounds = array<i64: 1, 8, 32>}, {transform_indices = @transform_6, window_bounds = array<i64: 1, 8, 32>}]} {
    %c0 = arith.constant 0 : index
    %c0_0 = arith.constant 0 : index
    %0 = vector.load %arg1[%c0, %c0_0] : memref<16x16xbf16, #tpu.memory_space<vmem>>, vector<16x16xbf16>
    %c0_1 = arith.constant 0 : index
    %c0_2 = arith.constant 0 : index
    %1 = vector.load %arg2[%c0_1, %c0_2] : memref<16x8xbf16, #tpu.memory_space<vmem>>, vector<16x8xbf16>
    %cst = arith.constant dense<0.000000e+00> : vector<16x8xf32>
    %2 = tpu.matmul %0, %1, %cst {dimension_numbers = #tpu.dot_dimension_numbers<[1], [0], [0], [1], [0, 0, 1, 1], [], []>} : vector<16x16xbf16>, vector<16x8xbf16>, vector<16x8xf32> -> vector<16x8xf32>
    %3 = arith.truncf %2 : vector<16x8xf32> to vector<16x8xbf16>
    %c0_3 = arith.constant 0 : index
    %c0_4 = arith.constant 0 : index
    %4 = vector.load %arg3[%c0_3, %c0_4] : memref<8x32xbf16, #tpu.memory_space<vmem>>, vector<8x32xbf16>
    %cst_5 = arith.constant dense<0.000000e+00> : vector<16x32xf32>
    %5 = tpu.matmul %3, %4, %cst_5 {dimension_numbers = #tpu.dot_dimension_numbers<[1], [0], [0], [1], [0, 0, 1, 1], [], []>} : vector<16x8xbf16>, vector<8x32xbf16>, vector<16x32xf32> -> vector<16x32xf32>
    %c0_6 = arith.constant 0 : index
    %c0_7 = arith.constant 0 : index
    %6 = vector.load %arg4[%c0_6, %c0_7] : memref<1x32xf32, #tpu.memory_space<vmem>>, vector<1x32xf32>
    %7 = vector.broadcast %6 : vector<1x32xf32> to vector<16x32xf32>
    %8 = arith.addf %5, %7 : vector<16x32xf32>
    %cst_8 = arith.constant 0.000000e+00 : f32
    %9 = vector.broadcast %cst_8 : f32 to vector<16x32xf32>
    %10 = arith.maximumf %8, %9 : vector<16x32xf32>
    %c16_i32 = arith.constant 16 : i32
    %11 = arith.muli %arg0, %c16_i32 : i32
    %12 = tpu.iota {dimensions = array<i32: 0>} : vector<16x1xi32>
    %13 = vector.broadcast %11 : i32 to vector<16x1xi32>
    %14 = arith.addi %13, %12 : vector<16x1xi32>
    %c16_i32_9 = arith.constant 16 : i32
    %15 = vector.broadcast %c16_i32_9 : i32 to vector<16x1xi32>
    %16 = arith.cmpi slt, %14, %15 : vector<16x1xi32>
    %cst_10 = arith.constant 0.000000e+00 : f32
    %17 = vector.shape_cast %16 : vector<16x1xi1> to vector<16x1xi1>
    %18 = vector.broadcast %17 : vector<16x1xi1> to vector<16x32xi1>
    %19 = vector.broadcast %cst_10 : f32 to vector<16x32xf32>
    %20 = arith.select %18, %10, %19 : vector<16x32xi1>, vector<16x32xf32>
    %c0_11 = arith.constant 0 : index
    %c0_12 = arith.constant 0 : index
    %21 = vector.load %arg5[%c0_11, %c0_12] : memref<16x32xf32, #tpu.memory_space<vmem>>, vector<16x32xf32>
    tpu.vector_store %arg5[%c0_11, %c0_12], %20 {strides = array<i32>} : memref<16x32xf32, #tpu.memory_space<vmem>>, vector<16x32xf32>,
    %cst_13 = arith.constant dense<0.000000e+00> : vector<32xf32>
    %22 = vector.multi_reduction <add>, %20, %cst_13 [0] : vector<16x32xf32> to vector<32xf32>
    %23 = vector.shape_cast %22 : vector<32xf32> to vector<1x32xf32>
    %24 = arith.mulf %20, %20 : vector<16x32xf32>
    %cst_14 = arith.constant dense<0.000000e+00> : vector<32xf32>
    %25 = vector.multi_reduction <add>, %24, %cst_14 [0] : vector<16x32xf32> to vector<32xf32>
    %26 = vector.shape_cast %25 : vector<32xf32> to vector<1x32xf32>
    %27 = vector.shape_cast %23 : vector<1x32xf32> to vector<1x1x32xf32>
    %28 = vector.shape_cast %27 : vector<1x1x32xf32> to vector<1x1x32xf32>
    %29 = vector.broadcast %28 : vector<1x1x32xf32> to vector<1x8x32xf32>
    %c0_15 = arith.constant 0 : index
    %c0_16 = arith.constant 0 : index
    %c0_17 = arith.constant 0 : index
    %30 = vector.load %arg6[%c0_15, %c0_16, %c0_17] : memref<1x8x32xf32, #tpu.memory_space<vmem>>, vector<1x8x32xf32>
    tpu.vector_store %arg6[%c0_15, %c0_16, %c0_17], %29 {strides = array<i32>} : memref<1x8x32xf32, #tpu.memory_space<vmem>>, vector<1x8x32xf32>,
    %31 = vector.shape_cast %26 : vector<1x32xf32> to vector<1x1x32xf32>
    %32 = vector.shape_cast %31 : vector<1x1x32xf32> to vector<1x1x32xf32>
    %33 = vector.broadcast %32 : vector<1x1x32xf32> to vector<1x8x32xf32>
    %c0_18 = arith.constant 0 : index
    %c0_19 = arith.constant 0 : index
    %c0_20 = arith.constant 0 : index
    %34 = vector.load %arg7[%c0_18, %c0_19, %c0_20] : memref<1x8x32xf32, #tpu.memory_space<vmem>>, vector<1x8x32xf32>
    tpu.vector_store %arg7[%c0_18, %c0_19, %c0_20], %33 {strides = array<i32>} : memref<1x8x32xf32, #tpu.memory_space<vmem>>, vector<1x8x32xf32>,
    return
  }
  func.func @transform_0(%arg0: i32) -> (i32, i32) {
    %c0_i32 = arith.constant 0 : i32
    %c0_i32_0 = arith.constant 0 : i32
    return %arg0, %c0_i32 : i32, i32
  }
  func.func @transform_1(%arg0: i32) -> (i32, i32) {
    %c0_i32 = arith.constant 0 : i32
    %c0_i32_0 = arith.constant 0 : i32
    %c0_i32_1 = arith.constant 0 : i32
    return %c0_i32, %c0_i32_0 : i32, i32
  }
  func.func @transform_2(%arg0: i32) -> (i32, i32) {
    %c0_i32 = arith.constant 0 : i32
    %c0_i32_0 = arith.constant 0 : i32
    %c0_i32_1 = arith.constant 0 : i32
    return %c0_i32, %c0_i32_0 : i32, i32
  }
  func.func @transform_3(%arg0: i32) -> (i32, i32) {
    %c0_i32 = arith.constant 0 : i32
    %c0_i32_0 = arith.constant 0 : i32
    %c0_i32_1 = arith.constant 0 : i32
    return %c0_i32, %c0_i32_0 : i32, i32
  }
  func.func @transform_4(%arg0: i32) -> (i32, i32) {
    %c0_i32 = arith.constant 0 : i32
    %c0_i32_0 = arith.constant 0 : i32
    return %arg0, %c0_i32 : i32, i32
  }
  func.func @transform_5(%arg0: i32) -> (i32, i32, i32) {
    %c0_i32 = arith.constant 0 : i32
    %c0_i32_0 = arith.constant 0 : i32
    %c0_i32_1 = arith.constant 0 : i32
    return %arg0, %c0_i32, %c0_i32_0 : i32, i32, i32
  }
  func.func @transform_6(%arg0: i32) -> (i32, i32, i32) {
    %c0_i32 = arith.constant 0 : i32
    %c0_i32_0 = arith.constant 0 : i32
    %c0_i32_1 = arith.constant 0 : i32
    return %arg0, %c0_i32, %c0_i32_0 : i32, i32, i32
  }
}

</mosaic_0001>

<llo_original>
// kernel: tpu_custom_call.1
$region0: #{tpu_custom_call.1}
  #allocation0 [shape = 'u32[]', space=smem, size = 0x4, offset = 0x4, fixed_abs, tag = 'smem constant byte address 0x4 - core index']
  #allocation1 [shape = 'u32[144,128]{1,0:T(1,128)}', space=vmem, size = 0x12000, scoped, tag = 'internal scratch']
  %s0 = inlined_call_operand.vmem [shape: bf16[16,16], index: 0, kind: input, shape index: {}]
  %s1 = inlined_call_operand.vmem [shape: bf16[16,8], index: 1, kind: input, shape index: {}]
  %s2 = inlined_call_operand.vmem [shape: bf16[8,32], index: 2, kind: input, shape index: {}]
  %s3 = inlined_call_operand.vmem [shape: f32[1,32], index: 3, kind: input, shape index: {}]
  %s4 = inlined_call_operand.hbm [shape: f32[16,32], index: 4, kind: output, shape index: {0}]
  %s5 = inlined_call_operand.hbm [shape: f32[1,8,32], index: 5, kind: output, shape index: {1}]
  %s6 = inlined_call_operand.hbm [shape: f32[1,8,32], index: 6, kind: output, shape index: {2}]
  %7 = xla_tuple %s4, %s5, %s6
  %s8 = sld [smem:[#allocation0]]
  $region42: #{tpu_custom_call.1} parent=0
    _
  %s10 = ssub.s32 1, %s8
  %s11 = scalar_select 0, %s10, %s8
  $region1: #{tpu_custom_call.1} parent=0
    #allocation2 [shape = 'u8[8192]{0}', space=vmem, size = 0x2000, scoped, tag = 'output window, operand 0, single buffered']
    #allocation3 [shape = 's32[1]{0}', space=sflag, size = 0x4, scoped, tag = 'scoped memory for tpu_custom_call.1']
    #allocation4 [shape = 'u8[4096]{0}', space=vmem, size = 0x1000, scoped, tag = 'output window, operand 1, single buffered']
    #allocation5 [shape = 's32[1]{0}', space=sflag, size = 0x4, scoped, tag = 'scoped memory for tpu_custom_call.1']
    #allocation6 [shape = 'u8[4096]{0}', space=vmem, size = 0x1000, scoped, tag = 'output window, operand 2, single buffered']
    %12 = vsyncpa [#allocation3], 0
    %13 = vsyncpa [#allocation5], 0
    // Predicated region
    $region2: #{tpu_custom_call.1} parent=1 // pred_check
      _
    $region3: #{tpu_custom_call.1} parent=1 // pred_check_branch
      %15 = sbr.rel (0) target = $region5
    $region4: #{tpu_custom_call.1} parent=1 // pred_region
      _
    $region5: #{tpu_custom_call.1} parent=1 // pred_fallthru
      _
    // Predicated region
    $region6: #{tpu_custom_call.1} parent=1 // pred_check
      _
    $region7: #{tpu_custom_call.1} parent=1 // pred_check_branch
      %17 = sbr.rel (0) target = $region9
    $region8: #{tpu_custom_call.1} parent=1 // pred_region
      _
    $region9: #{tpu_custom_call.1} parent=1 // pred_fallthru
      _
    // Predicated region
    $region10: #{tpu_custom_call.1} parent=1 // pred_check
      _
    $region11: #{tpu_custom_call.1} parent=1 // pred_check_branch
      %19 = sbr.rel (0) target = $region13
    $region12: #{tpu_custom_call.1} parent=1 // pred_region
      _
    $region13: #{tpu_custom_call.1} parent=1 // pred_fallthru
      _
    // Predicated region
    $region14: #{tpu_custom_call.1} parent=1 // pred_check
      _
    $region15: #{tpu_custom_call.1} parent=1 // pred_check_branch
      %21 = sbr.rel (0) target = $region17
    $region16: #{tpu_custom_call.1} parent=1 // pred_region
      _
    $region17: #{tpu_custom_call.1} parent=1 // pred_fallthru
      _
    %v23 = vld [vmem:[%s0] sm:$0xf]
    %v24 = vld [vmem:[%s0 + $0x4] sm:$0xf]
    %v25 = vld [vmem:[%s1] sm:$0xf]
    %v26 = vld [vmem:[%s1 + $0x4] sm:$0xf]
    %v29 = vunpack.c.l.b16 %v23
    %v30 = vunpack.c.l.b16 %v24
    %v31 = vpack.c.b16 %v30, %v29
    %v34 = vunpack.c.l.b16 %v25
    %v35 = vunpack.c.l.b16 %v26
    %v36 = vpack.c.b16 %v35, %v34
    %vm38 = vcmask 130048
    %v40 = vsel %vm38, %v31, 0
    %42 = vmatprep.subr.bf16.mxu0 0
    %43 = vmatpush1.bf16.msra.mxu0 %v36
    %44 = vmatprep.subr.bf16.mxu0 0
    %45 = vmatpush1.bf16.msra.mxu0 0
    %46 = vmatprep.subr.bf16.mxu0 0
    %47 = vmatpush1.bf16.msra.mxu0 0
    %48 = vmatprep.subr.bf16.mxu0 0
    %49 = vmatpush1.bf16.msra.mxu0 0
    %50 = vmatprep.subr.bf16.mxu0 0
    %51 = vmatpush1.bf16.msra.mxu0 0
    %52 = vmatprep.subr.bf16.mxu0 0
    %53 = vmatpush1.bf16.msra.mxu0 0
    %54 = vmatprep.subr.bf16.mxu0 0
    %55 = vmatpush1.bf16.msra.mxu0 0
    %56 = vmatprep.subr.bf16.mxu0 0
    %57 = vmatpush1.bf16.msra.mxu0 0
    %58 = vmatprep.subr.bf16.mxu0 0
    %59 = vmatpush1.bf16.msra.mxu0 0
    %60 = vmatprep.subr.bf16.mxu0 0
    %61 = vmatpush1.bf16.msra.mxu0 0
    %62 = vmatprep.subr.bf16.mxu0 0
    %63 = vmatpush1.bf16.msra.mxu0 0
    %64 = vmatprep.subr.bf16.mxu0 0
    %65 = vmatpush1.bf16.msra.mxu0 0
    %66 = vmatprep.subr.bf16.mxu0 0
    %67 = vmatpush1.bf16.msra.mxu0 0
    %68 = vmatprep.subr.bf16.mxu0 0
    %69 = vmatpush1.bf16.msra.mxu0 0
    %70 = vmatprep.subr.bf16.mxu0 0
    %71 = vmatpush1.bf16.msra.mxu0 0
    %72 = vmatprep.subr.bf16.mxu0 0
    %73 = vmatpush1.bf16.msra.mxu0 0
    %74 = vmatprep.mubr.bf16.mxu0 0
    %75 = vmatmul.mubr.bf16.gmra.mrb[0].mxu0 %v40
    %v76 = vpop.f32.mrb[0].mxu0
    %v77 = vadd.f32 0.0, %v76
    %v78 = vpop.f32.mrb[0].mxu0
    %v79 = vpop.f32.mrb[0].mxu0
    %v80 = vadd.f32 0.0, %v79
    %v81 = vpop.f32.mrb[0].mxu0
    %82 = vdwg.mxu0
    %v83 = vpack.c.bf16 %v80, %v77
    %v84 = vld [vmem:[%s2] sm:$0xf]
    %v85 = vld [vmem:[%s3] sm:$0x1]
    %v87 = vlaneseq
    %v88 = vshrl.u32 %v87, 7
    %v89 = vsub.s32 0, %v88
    %v90 = vrot.slane %v85, %v89
    %vm92 = vcmask 64512
    %v94 = vsel %vm92, %v83, 0
    %vm96 = vcmask 1043456
    %v98 = vsel %vm96, %v84, 0
    %100 = vmatprep.subr.bf16.mxu0 0
    %101 = vmatpush1.bf16.msra.mxu0 %v98
    %102 = vmatprep.subr.bf16.mxu0 0
    %103 = vmatpush1.bf16.msra.mxu0 0
    %104 = vmatprep.subr.bf16.mxu0 0
    %105 = vmatpush1.bf16.msra.mxu0 0
    %106 = vmatprep.subr.bf16.mxu0 0
    %107 = vmatpush1.bf16.msra.mxu0 0
    %108 = vmatprep.subr.bf16.mxu0 0
    %109 = vmatpush1.bf16.msra.mxu0 0
    %110 = vmatprep.subr.bf16.mxu0 0
    %111 = vmatpush1.bf16.msra.mxu0 0
    %112 = vmatprep.subr.bf16.mxu0 0
    %113 = vmatpush1.bf16.msra.mxu0 0
    %114 = vmatprep.subr.bf16.mxu0 0
    %115 = vmatpush1.bf16.msra.mxu0 0
    %116 = vmatprep.subr.bf16.mxu0 0
    %117 = vmatpush1.bf16.msra.mxu0 0
    %118 = vmatprep.subr.bf16.mxu0 0
    %119 = vmatpush1.bf16.msra.mxu0 0
    %120 = vmatprep.subr.bf16.mxu0 0
    %121 = vmatpush1.bf16.msra.mxu0 0
    %122 = vmatprep.subr.bf16.mxu0 0
    %123 = vmatpush1.bf16.msra.mxu0 0
    %124 = vmatprep.subr.bf16.mxu0 0
    %125 = vmatpush1.bf16.msra.mxu0 0
    %126 = vmatprep.subr.bf16.mxu0 0
    %127 = vmatpush1.bf16.msra.mxu0 0
    %128 = vmatprep.subr.bf16.mxu0 0
    %129 = vmatpush1.bf16.msra.mxu0 0
    %130 = vmatprep.subr.bf16.mxu0 0
    %131 = vmatpush1.bf16.msra.mxu0 0
    %132 = vmatprep.mubr.bf16.mxu0 0
    %133 = vmatmul.mubr.bf16.gmra.mrb[0].mxu0 %v94
    %v134 = vpop.f32.mrb[0].mxu0
    %v135 = vadd.f32 %v90, %v134
    %v136 = vpop.f32.mrb[0].mxu0
    %v137 = vpop.f32.mrb[0].mxu0
    %v138 = vadd.f32 %v90, %v137
    %v139 = vpop.f32.mrb[0].mxu0
    %140 = vdwg.mxu0
    %v141 = vmax.f32 %v135, 0.0
    %v142 = vmax.f32 %v138, 0.0
    %s143 = smul.u32 0, 16
    %v144 = vlaneseq
    %v145 = vshrl.u32 %v144, 7
    %v146 = vadd.s32 %v145, 8
    %v147 = vstv %s143
    %v148 = vadd.s32 %v147, %v145
    %v149 = vadd.s32 %v147, %v146
    %vm150 = vcmp.lt.s32.totalorder %v148, 16
    %vm151 = vcmp.lt.s32.totalorder %v149, 16
    %v152 = vsel %vm150, 1, 0
    %v153 = vsel %vm151, 1, 0
    %vm154 = vcmp.eq.s32.totalorder %v152, 1
    %vm155 = vcmp.eq.s32.totalorder %v153, 1
    %v156 = vsel %vm154, %v141, 0.0
    %v157 = vsel %vm155, %v142, 0.0
    %vm158 = vcmask 261120
    %159 = vst.msk [vmem:[#allocation2] sm:$0xff] %vm158, %v156
    %160 = vst.msk [vmem:[#allocation2 + $0x8] sm:$0xff] %vm158, %v157
    %v161 = vsel %vm158, %v156, 0.0
    %v162 = vsel %vm158, %v157, 0.0
    %v163 = vadd.f32 %v161, %v162
    %v164 = vrot.slane %v163, 4
    %v165 = vadd.f32 %v163, %v164
    %v166 = vrot.slane %v165, 2
    %v167 = vadd.f32 %v165, %v166
    %v168 = vrot.slane %v167, 1
    %v169 = vadd.f32 %v167, %v168
    %v170 = vmul.f32 %v156, %v156
    %v171 = vmul.f32 %v157, %v157
    %v172 = vsel %vm158, %v170, 0.0
    %v173 = vsel %vm158, %v171, 0.0
    %v174 = vadd.f32 %v172, %v173
    %v175 = vrot.slane %v174, 4
    %v176 = vadd.f32 %v174, %v175
    %v177 = vrot.slane %v176, 2
    %v178 = vadd.f32 %v176, %v177
    %v179 = vrot.slane %v178, 1
    %v180 = vadd.f32 %v178, %v179
    %181 = vst.msk [vmem:[#allocation4] sm:$0xff] %vm158, %v169
    %182 = vst.msk [vmem:[#allocation6] sm:$0xff] %vm158, %v180
    // Predicated region
    $region18: #{tpu_custom_call.1} parent=1 // pred_check
      _
    $region19: #{tpu_custom_call.1} parent=1 // pred_check_branch
      %184 = sbr.rel (0) target = $region21
    $region20: #{tpu_custom_call.1} parent=1 // pred_region
      %s186 = ssub.s32 256, 256
      %187 = vsyncadd [#allocation3], %s186
      %s188 = sshll.u32 [#allocation2], 4
      %s189 = int_to_ptr.vmem [resolvable:$true] %s188
      %194 = dma.vmem_to_hbm [thread:$0]  %s189, 256, %s4, [#allocation3], 128, 128, 8
    $region21: #{tpu_custom_call.1} parent=1 // pred_fallthru
      _
    // Predicated region
    $region22: #{tpu_custom_call.1} parent=1 // pred_check
      _
    $region23: #{tpu_custom_call.1} parent=1 // pred_check_branch
      %196 = sbr.rel (0) target = $region25
    $region24: #{tpu_custom_call.1} parent=1 // pred_region
      %s198 = ssub.s32 128, 128
      %199 = vsyncadd [#allocation5], %s198
      %s201 = sshll.u32 [#allocation4], 4
      %s202 = int_to_ptr.vmem [resolvable:$true] %s201
      %204 = dma.vmem_to_hbm [thread:$0]  %s202, 128, %s5, [#allocation5]
    $region25: #{tpu_custom_call.1} parent=1 // pred_fallthru
      _
    // Predicated region
    $region26: #{tpu_custom_call.1} parent=1 // pred_check
      _
    $region27: #{tpu_custom_call.1} parent=1 // pred_check_branch
      %206 = sbr.rel (0) target = $region29
    $region28: #{tpu_custom_call.1} parent=1 // pred_region
      %s208 = ssub.s32 128, 128
      %209 = vsyncadd [#allocation5], %s208
      %s211 = sshll.u32 [#allocation6], 4
      %s212 = int_to_ptr.vmem [resolvable:$true] %s211
      %214 = dma.vmem_to_hbm [thread:$0]  %s212, 128, %s6, [#allocation5]
    $region29: #{tpu_custom_call.1} parent=1 // pred_fallthru
      _
    // Predicated region
    $region30: #{tpu_custom_call.1} parent=1 // pred_check
      _
    $region31: #{tpu_custom_call.1} parent=1 // pred_check_branch
      %216 = sbr.rel (0) target = $region33
    $region32: #{tpu_custom_call.1} parent=1 // pred_region
      %217 = dma.done [#allocation3], 256
    $region33: #{tpu_custom_call.1} parent=1 // pred_fallthru
      _
    // Predicated region
    $region34: #{tpu_custom_call.1} parent=1 // pred_check
      _
    $region35: #{tpu_custom_call.1} parent=1 // pred_check_branch
      %219 = sbr.rel (0) target = $region37
    $region36: #{tpu_custom_call.1} parent=1 // pred_region
      %220 = dma.done [#allocation5], 128
    $region37: #{tpu_custom_call.1} parent=1 // pred_fallthru
      _
    // Predicated region
    $region38: #{tpu_custom_call.1} parent=1 // pred_check
      _
    $region39: #{tpu_custom_call.1} parent=1 // pred_check_branch
      %222 = sbr.rel (0) target = $region41
    $region40: #{tpu_custom_call.1} parent=1 // pred_region
      %223 = dma.done [#allocation5], 128
    $region41: #{tpu_custom_call.1} parent=1 // pred_fallthru
      _
    %224 = vsyncpa [#allocation3], 1
    %225 = vsyncpa [#allocation5], 1

</llo_original>
